<compile_context>
chip_gen: v5e
topology: v5e:2x2
jax: 0.10.0
libtpu: 0.0.40
codegen_flags: <defaults>
</compile_context>

<pallas_src>
import jax
import jax.numpy as jnp
from jax.experimental import pallas as pl
from jax.experimental.pallas import tpu as pltpu


def _round_up(x, m):
    return ((x + m - 1) // m) * m


def _vmem_limit(needed_bytes):
    # needed + margin, floor 16 MiB, cap 32 MiB (v7x headroom), never below needed.
    limit = max(needed_bytes + (4 << 20), 16 << 20)
    limit = min(limit, 32 << 20)
    return int(max(limit, needed_bytes + (1 << 20)))


# ---------------------------------------------------------------------------
# Phase 1: tiled global-avg-pool reduce + 1x1 conv (matvec) + ReLU.
# ---------------------------------------------------------------------------
def _make_reduce_conv_relu_kernel(n_hw, tile, rem, inv_hw):
    """rem = number of valid lanes in the last hw block (static)."""
    n_chunks = tile // 128
    ragged = rem < tile

    def kernel(x_ref, w_ref, act_ref, acc_ref):
        # x_ref:   (1, C_in, tile)   spatial tile (last block ragged -> masked)
        # w_ref:   (C_out, C_in)     conv weight, native dtype
        # act_ref: (1, C_out, 1) f32 relu(conv(mean)) per batch element
        # acc_ref: (C_in, 128)  f32  lane-wide running spatial sum
        hw = pl.program_id(1)

        @pl.when(hw == 0)
        def _():
            acc_ref[...] = jnp.zeros_like(acc_ref)

        def accumulate(mask_tail):
            x = x_ref[0].astype(jnp.float32)                       # (C_in, tile)
            if mask_tail:
                lane = jax.lax.broadcasted_iota(jnp.int32, x.shape, 1)
                x = jnp.where(lane < rem, x, 0.0)
            acc = acc_ref[...]                                     # (C_in, 128)
            for c in range(n_chunks):                              # lane-aligned, VPU-only
                acc = acc + x[:, c * 128:(c + 1) * 128]
            acc_ref[...] = acc

        if ragged and n_hw > 1:
            @pl.when(hw < n_hw - 1)
            def _():
                accumulate(False)

            @pl.when(hw == n_hw - 1)
            def _():
                accumulate(True)
        else:
            accumulate(ragged)

        @pl.when(hw == n_hw - 1)
        def _():
            total = jnp.sum(acc_ref[...], axis=1, keepdims=True)   # (C_in, 1)
            mean = total * inv_hw                                  # avg-pool normalization
            y = jnp.dot(w_ref[...].astype(jnp.float32), mean,
                        preferred_element_type=jnp.float32)        # (C_out, 1)
            act_ref[0] = jnp.maximum(y, 0.0)

    return kernel


# ---------------------------------------------------------------------------
# Phase 2: broadcast the (C_out, 1) activation across a lane-dense spatial tile.
# (Bilinear upsample of a 1x1 map with align_corners=True == broadcast.)
# ---------------------------------------------------------------------------
def _broadcast_kernel(act_ref, o_ref):
    # act_ref: (1, C_out, 1) f32    o_ref: (1, C_out, tile_b)
    o_ref[0] = jnp.broadcast_to(act_ref[0].astype(o_ref.dtype), o_ref.shape[1:])


def assp_avg_pooling_branch(x, conv_weight, *, materialize_output=True,
                            max_tile_lanes=None):
    """AsspAvgPoolingBranch forward (use_bn=False).

    x:           (N, C_in, H, W)
    conv_weight: (C_out, C_in, 1, 1)   Conv2d(k=1, bias=False) weight
    returns:     (N, C_out, H, W)   (or (N, C_out, 1, 1) if materialize_output=False)
    """
    N, C_in, H, W = x.shape
    C_out = conv_weight.shape[0]
    HW = H * W
    itemsize = jnp.dtype(x.dtype).itemsize
    w2d = conv_weight.reshape(C_out, C_in)          # keep native dtype; f32 accum in-kernel
    w_item = jnp.dtype(w2d.dtype).itemsize

    # ----- phase 1 tile: sized from C_in (double-buffered x block ~<=12 MiB) -----
    lane_budget = (12 << 20) // max(1, 2 * C_in * itemsize)
    max_lanes_r = max(256, min(16384, (lane_budget // 128) * 128))
    if max_tile_lanes is not None:
        max_lanes_r = min(max_lanes_r, max_tile_lanes)
    tile = min(_round_up(HW, 128), max_lanes_r)
    n_hw = -(-HW // tile)
    rem = HW - (n_hw - 1) * tile                    # valid lanes in the last block

    x_flat = x.reshape(N, C_in, HW)                 # NO padding: tail masked in-kernel

    vmem1 = (2 * (C_in * tile * itemsize + C_out * C_in * w_item + C_out * 4)
             + C_in * 128 * 4)

    act = pl.pallas_call(
        _make_reduce_conv_relu_kernel(n_hw, tile, rem, 1.0 / float(HW)),
        out_shape=jax.ShapeDtypeStruct((N, C_out, 1), jnp.float32),
        grid_spec=pltpu.PrefetchScalarGridSpec(
            num_scalar_prefetch=0,
            grid=(N, n_hw),
            in_specs=[
                pl.BlockSpec((1, C_in, tile), lambda n, hw: (n, 0, hw)),
                pl.BlockSpec((C_out, C_in), lambda n, hw: (0, 0)),
            ],
            out_specs=pl.BlockSpec((1, C_out, 1), lambda n, hw: (n, 0, 0)),
            scratch_shapes=[pltpu.VMEM((C_in, 128), jnp.float32)],
        ),
        compiler_params=pltpu.CompilerParams(
            dimension_semantics=("parallel", "arbitrary"),  # reduction axis last
            vmem_limit_bytes=_vmem_limit(vmem1)),
    )(x_flat, w2d)

    if not materialize_output:
        # Consumer broadcasts/fuses the 1x1 activation itself.
        return act.reshape(N, C_out, 1, 1).astype(x.dtype)

    # ----- phase 2 tile: large lane-dense output block (~16 MiB double-buffered) -----
    lane_budget_b = (16 << 20) // max(1, 2 * C_out * itemsize)
    max_lanes_b = max(512, min(32768, (lane_budget_b // 128) * 128))
    if max_tile_lanes is not None:
        max_lanes_b = min(max_lanes_b, max_tile_lanes)
    tile_b = min(_round_up(HW, 128), max_lanes_b)
    n_hw_b = -(-HW // tile_b)

    vmem2 = 2 * (C_out * 4 + C_out * tile_b * itemsize)

    out_flat = pl.pallas_call(
        _broadcast_kernel,
        out_shape=jax.ShapeDtypeStruct((N, C_out, HW), x.dtype),  # unpadded: no post slice
        grid_spec=pltpu.PrefetchScalarGridSpec(
            num_scalar_prefetch=0,
            grid=(N, n_hw_b),
            in_specs=[pl.BlockSpec((1, C_out, 1), lambda n, hw: (n, 0, 0))],
            out_specs=pl.BlockSpec((1, C_out, tile_b), lambda n, hw: (n, 0, hw)),
        ),
        compiler_params=pltpu.CompilerParams(
            dimension_semantics=("parallel", "parallel"),  # shard both across TCs
            vmem_limit_bytes=_vmem_limit(vmem2)),
    )(act)

    return out_flat.reshape(N, C_out, H, W)


def _reference(x, conv_weight):
    # Pure-JAX reference of the same forward pass.
    N, C_in, H, W = x.shape
    C_out = conv_weight.shape[0]
    mean = jnp.mean(x, axis=(2, 3))                       # (N, C_in)
    y = mean @ conv_weight.reshape(C_out, C_in).T         # (N, C_out)
    y = jnp.maximum(y, 0.0)
    return jnp.broadcast_to(y[:, :, None, None], (N, C_out, H, W))


if __name__ == "__main__":
    key = jax.random.PRNGKey(0)
    kx, kw, kx2, kx3 = jax.random.split(key, 4)

    # Small shapes consistent with the module.
    N, C_in, C_out, H, W = 2, 4, 8, 16, 16
    x = jax.random.normal(kx, (N, C_in, H, W), dtype=jnp.float32)
    conv_weight = jax.random.normal(kw, (C_out, C_in, 1, 1), dtype=jnp.float32) * 0.1

    out = jax.block_until_ready(assp_avg_pooling_branch(x, conv_weight))
    ref = _reference(x, conv_weight)
    assert out.shape == (N, C_out, H, W)
    assert jnp.allclose(out, ref, atol=1e-5, rtol=1e-5), "mismatch vs reference"

    # Non-multiple-of-128 spatial size: single ragged block, masked reduce + masked store.
    H2, W2 = 10, 10
    x2 = jax.random.normal(kx2, (N, C_in, H2, W2), dtype=jnp.float32)
    out2 = jax.block_until_ready(assp_avg_pooling_branch(x2, conv_weight))
    ref2 = _reference(x2, conv_weight)
    assert out2.shape == (N, C_out, H2, W2)
    assert jnp.allclose(out2, ref2, atol=1e-5, rtol=1e-5), "mismatch (ragged HW)"

    # Multi-block path: force a 128-lane tile so the reduce spans several blocks with a
    # ragged last block, and the broadcast writes several (ragged-last) blocks.
    H3, W3 = 20, 20
    x3 = jax.random.normal(kx3, (N, C_in, H3, W3), dtype=jnp.float32)
    out3 = jax.block_until_ready(
        assp_avg_pooling_branch(x3, conv_weight, max_tile_lanes=128))
    ref3 = _reference(x3, conv_weight)
    assert out3.shape == (N, C_out, H3, W3)
    assert jnp.allclose(out3, ref3, atol=1e-5, rtol=1e-5), "mismatch (multi-block)"

    # Fused-consumer path: return the pooled activation only (no broadcast materialized).
    act_only = jax.block_until_ready(
        assp_avg_pooling_branch(x, conv_weight, materialize_output=False))
    assert act_only.shape == (N, C_out, 1, 1)
    assert jnp.allclose(act_only, ref[:, :, :1, :1], atol=1e-5, rtol=1e-5), \
        "mismatch (pooled activation)"

    print("KERNEL_OK")
</pallas_src>

<mosaic_0001>
module attributes {stable_mosaic.version = 11 : i64} {
  func.func @kernel(%arg0: i32, %arg1: i32, %arg2: memref<1x4x256xf32, #tpu.memory_space<vmem>>, %arg3: memref<8x4xf32, #tpu.memory_space<vmem>>, %arg4: memref<1x8x1xf32, #tpu.memory_space<vmem>>, %arg5: memref<4x128xf32, #tpu.memory_space<vmem>>) attributes {dimension_semantics = [#tpu.dimension_semantics<parallel>, #tpu.dimension_semantics<arbitrary>], iteration_bounds = array<i64: 2, 1>, scalar_prefetch = 0 : i64, scratch_operands = 1 : i64, tpu.core_type = #tpu.core_type<tc>, window_params = [{transform_indices = @transform_0, window_bounds = array<i64: 1, 4, 256>}, {pipeline_mode = #tpu.pipeline_mode<synchronous>, transform_indices = @transform_1, window_bounds = array<i64: 8, 4>}, {transform_indices = @transform_2, window_bounds = array<i64: 1, 8, 1>}]} {
    %c0_i32 = arith.constant 0 : i32
    %0 = arith.cmpi eq, %arg1, %c0_i32 : i32
    %1 = arith.extui %0 : i1 to i32
    %c0_i32_0 = arith.constant 0 : i32
    %2 = arith.cmpi ne, %1, %c0_i32_0 : i32
    scf.if %2 {
      %cst = arith.constant 0.000000e+00 : f32
      %14 = vector.broadcast %cst : f32 to vector<4x128xf32>
      %c0_9 = arith.constant 0 : index
      %c0_10 = arith.constant 0 : index
      %15 = vector.load %arg5[%c0_9, %c0_10] : memref<4x128xf32, #tpu.memory_space<vmem>>, vector<4x128xf32>
      tpu.vector_store %arg5[%c0_9, %c0_10], %14 {strides = array<i32>} : memref<4x128xf32, #tpu.memory_space<vmem>>, vector<4x128xf32>,
    } else {
    }
    %c0 = arith.constant 0 : index
    %c0_1 = arith.constant 0 : index
    %c0_2 = arith.constant 0 : index
    %3 = vector.load %arg2[%c0, %c0_1, %c0_2] : memref<1x4x256xf32, #tpu.memory_space<vmem>>, vector<1x4x256xf32>
    %4 = vector.shape_cast %3 : vector<1x4x256xf32> to vector<4x256xf32>
    %c0_3 = arith.constant 0 : index
    %c0_4 = arith.constant 0 : index
    %5 = vector.load %arg5[%c0_3, %c0_4] : memref<4x128xf32, #tpu.memory_space<vmem>>, vector<4x128xf32>
    %6 = vector.extract_strided_slice %4 {offsets = [0, 0], sizes = [4, 128], strides = [1, 1]} : vector<4x256xf32> to vector<4x128xf32>
    %7 = arith.addf %5, %6 : vector<4x128xf32>
    %8 = vector.extract_strided_slice %4 {offsets = [0, 128], sizes = [4, 128], strides = [1, 1]} : vector<4x256xf32> to vector<4x128xf32>
    %9 = arith.addf %7, %8 : vector<4x128xf32>
    %c0_5 = arith.constant 0 : index
    %c0_6 = arith.constant 0 : index
    %10 = vector.load %arg5[%c0_5, %c0_6] : memref<4x128xf32, #tpu.memory_space<vmem>>, vector<4x128xf32>
    tpu.vector_store %arg5[%c0_5, %c0_6], %9 {strides = array<i32>} : memref<4x128xf32, #tpu.memory_space<vmem>>, vector<4x128xf32>,
    %c0_i32_7 = arith.constant 0 : i32
    %11 = arith.cmpi eq, %arg1, %c0_i32_7 : i32
    %12 = arith.extui %11 : i1 to i32
    %c0_i32_8 = arith.constant 0 : i32
    %13 = arith.cmpi ne, %12, %c0_i32_8 : i32
    scf.if %13 {
      %c0_9 = arith.constant 0 : index
      %c0_10 = arith.constant 0 : index
      %14 = vector.load %arg5[%c0_9, %c0_10] : memref<4x128xf32, #tpu.memory_space<vmem>>, vector<4x128xf32>
      %cst = arith.constant dense<0.000000e+00> : vector<4xf32>
      %15 = vector.multi_reduction <add>, %14, %cst [1] : vector<4x128xf32> to vector<4xf32>
      %16 = vector.shape_cast %15 : vector<4xf32> to vector<4x1xf32>
      %cst_11 = arith.constant 3.906250e-03 : f32
      %17 = vector.broadcast %cst_11 : f32 to vector<4x1xf32>
      %18 = arith.mulf %16, %17 : vector<4x1xf32>
      %c0_12 = arith.constant 0 : index
      %c0_13 = arith.constant 0 : index
      %19 = vector.load %arg3[%c0_12, %c0_13] : memref<8x4xf32, #tpu.memory_space<vmem>>, vector<8x4xf32>
      %cst_14 = arith.constant dense<0.000000e+00> : vector<8x1xf32>
      %20 = tpu.matmul %19, %18, %cst_14 {dimension_numbers = #tpu.dot_dimension_numbers<[1], [0], [0], [1], [0, 0, 1, 1], [], []>} : vector<8x4xf32>, vector<4x1xf32>, vector<8x1xf32> -> vector<8x1xf32>
      %cst_15 = arith.constant 0.000000e+00 : f32
      %21 = vector.broadcast %cst_15 : f32 to vector<8x1xf32>
      %22 = arith.maximumf %20, %21 : vector<8x1xf32>
      %c0_16 = arith.constant 0 : index
      %c0_17 = arith.constant 0 : index
      %c0_18 = arith.constant 0 : index
      %23 = vector.load %arg4[%c0_16, %c0_17, %c0_18] : memref<1x8x1xf32, #tpu.memory_space<vmem>>, vector<1x8x1xf32>
      %24 = vector.shape_cast %23 : vector<1x8x1xf32> to vector<8x1xf32>
      %25 = vector.shape_cast %22 : vector<8x1xf32> to vector<1x8x1xf32>
      tpu.vector_store %arg4[%c0_16, %c0_17, %c0_18], %25 {strides = array<i32>} : memref<1x8x1xf32, #tpu.memory_space<vmem>>, vector<1x8x1xf32>,
    } else {
    }
    return
  }
  func.func @transform_0(%arg0: i32, %arg1: i32) -> (i32, i32, i32) {
    %c0_i32 = arith.constant 0 : i32
    %c0_i32_0 = arith.constant 0 : i32
    return %arg0, %c0_i32, %arg1 : i32, i32, i32
  }
  func.func @transform_1(%arg0: i32, %arg1: i32) -> (i32, i32) {
    %c0_i32 = arith.constant 0 : i32
    %c0_i32_0 = arith.constant 0 : i32
    %c0_i32_1 = arith.constant 0 : i32
    return %c0_i32, %c0_i32_0 : i32, i32
  }
  func.func @transform_2(%arg0: i32, %arg1: i32) -> (i32, i32, i32) {
    %c0_i32 = arith.constant 0 : i32
    %c0_i32_0 = arith.constant 0 : i32
    %c0_i32_1 = arith.constant 0 : i32
    return %arg0, %c0_i32, %c0_i32_0 : i32, i32, i32
  }
}

</mosaic_0001>

<llo_original>
// kernel: tpu_custom_call.1
$region0: #{tpu_custom_call.1}
  #allocation0 [shape = 'u32[]', space=smem, size = 0x4, offset = 0x4, fixed_abs, tag = 'smem constant byte address 0x4 - core index']
  #allocation1 [shape = 'u32[72,128]{1,0:T(1,128)}', space=vmem, size = 0x9000, scoped, tag = 'internal scratch']
  #allocation2 [shape = 'f32[4,128]{1,0:T(4,128)}', space=vmem, size = 0x800, scoped, tag = 'scratch operand']
  %s0 = inlined_call_operand.hbm [shape: f32[2,4,256], index: 0, kind: input, shape index: {}]
  %s1 = inlined_call_operand.vmem [shape: f32[8,4], index: 1, kind: input, shape index: {}]
  %s2 = inlined_call_operand.vmem [shape: f32[2,8,1], index: 2, kind: output, shape index: {}]
  %s3 = sld [smem:[#allocation0]]
  $region53: #{tpu_custom_call.1} parent=0
    _
  %s5 = ssub.s32 1, %s3
  %s6 = scalar_select 0, %s5, %s3
  $region1: #{tpu_custom_call.1} parent=0
    #allocation3 [shape = 'u8[8192]{0}', space=vmem, size = 0x2000, scoped, tag = 'input window, operand 0']
    #allocation4 [shape = 's32[2]{0}', space=sflag, size = 0x8, scoped, tag = 'scoped memory for tpu_custom_call.1']
    %7 = vsyncpa [#allocation4], 0
    %s8 = scalar_lea.sflag [#allocation4], 1
    %9 = vsyncpa %s8, 0
    loop: start=0, step=1, limit=4
    $region2: #{tpu_custom_call.1} parent=1 // loop_pre_header
      _
    $region3: #{tpu_custom_call.1} parent=1 // loop_header
      %s11 = sphi 0, %s15
      %p12 = scmp.ge.s32.totalorder %s11, 4
      %s18 = sphi 0, %s30
      %s19 = sphi 0, %s26
      %s20 = sphi 0, %s18
      %s21 = sphi 0, %s19
      %s22 = sphi 0, %s20
      %s23 = sphi 0, %s21
      %s35 = sphi 0, %s37
      %s38 = sphi 0, %s35
      %s39 = sphi 0, %s38
      %s55 = sphi 0, %s39
      %s59 = sphi 0, %s59
      %s61 = sphi 0, %s59
      %s62 = sphi 0, %s61
      %s76 = sphi 0, %s62
      %s82 = sphi 0, %s84
      %s85 = sphi 0, %s82
      %s86 = sphi 0, %s85
      %s102 = sphi 0, %s86
    $region4: #{tpu_custom_call.1} parent=1 // loop_header_branch
      %14 = sbr.rel (%p12) target = $region8
    $region5: #{tpu_custom_call.1} parent=1 // loop_body
      %s16 = ssub.s32 %s11, 1
      %s17 = ssub.s32 %s11, 2
      %s24 = sadd.s32 1, %s19
      %p25 = scmp.ge.s32.totalorder %s24, 1
      %s26 = scalar_select %p25, 0, %s24
      %s27 = sadd.s32 1, %s18
      %s28 = scalar_select %p25, %s27, %s18
      %p29 = scmp.ge.s32.totalorder %s28, 2
      %s30 = scalar_select %p29, 0, %s28
      %s31 = ssub.s32 %s18, %s30
      %s32 = ssub.s32 %s19, %s26
      %s33 = sor.u32 %s31, %s32
      %p34 = scmp.eq.s32.totalorder %s33, 0
      %s36 = sadd.s32 %s35, 1
      %s37 = scalar_select %p34, %s35, %s36
      %p40 = pneg %p34
      %p41 = scmp.eq.s32.totalorder %s11, 1
      %p42 = por %p40, %p41
      %p43 = scmp.ne.s32.totalorder %s35, %s38
      %p44 = scmp.eq.s32.totalorder %s11, 0
      %p45 = por %p43, %p44
      %p46 = scmp.ne.s32.totalorder %s35, %s38
      %p47 = scmp.eq.s32.totalorder %s16, 1
      %p48 = por %p46, %p47
      %p49 = scmp.ne.s32.totalorder %s38, %s39
      %p50 = scmp.eq.s32.totalorder %s16, 0
      %p51 = por %p49, %p50
      %p52 = scmp.ne.s32.totalorder %s38, %s39
      %p53 = scmp.eq.s32.totalorder %s17, 1
      %p54 = por %p52, %p53
      %p56 = scmp.ne.s32.totalorder %s39, %s55
      %p57 = scmp.eq.s32.totalorder %s17, 0
      %p58 = por %p56, %p57
      %s60 = sadd.s32 %s59, 1
      %p63 = scmp.eq.s32.totalorder %s11, 1
      %p64 = scmp.ne.s32.totalorder %s59, %s61
      %p65 = scmp.eq.s32.totalorder %s11, 0
      %p66 = por %p64, %p65
      %p67 = scmp.ne.s32.totalorder %s59, %s61
      %p68 = scmp.eq.s32.totalorder %s16, 1
      %p69 = por %p67, %p68
      %p70 = scmp.ne.s32.totalorder %s61, %s62
      %p71 = scmp.eq.s32.totalorder %s16, 0
      %p72 = por %p70, %p71
      %p73 = scmp.ne.s32.totalorder %s61, %s62
      %p74 = scmp.eq.s32.totalorder %s17, 1
      %p75 = por %p73, %p74
      %p77 = scmp.ne.s32.totalorder %s62, %s76
      %p78 = scmp.eq.s32.totalorder %s17, 0
      %p79 = por %p77, %p78
      %s80 = ssub.s32 %s18, %s30
      %p81 = scmp.eq.s32.totalorder %s80, 0
      %s83 = sadd.s32 %s82, 1
      %s84 = scalar_select %p81, %s82, %s83
      %p87 = pneg %p81
      %p88 = scmp.eq.s32.totalorder %s11, 1
      %p89 = por %p87, %p88
      %p90 = scmp.ne.s32.totalorder %s82, %s85
      %p91 = scmp.eq.s32.totalorder %s11, 0
      %p92 = por %p90, %p91
      %p93 = scmp.ne.s32.totalorder %s82, %s85
      %p94 = scmp.eq.s32.totalorder %s16, 1
      %p95 = por %p93, %p94
      %p96 = scmp.ne.s32.totalorder %s85, %s86
      %p97 = scmp.eq.s32.totalorder %s16, 0
      %p98 = por %p96, %p97
      %p99 = scmp.ne.s32.totalorder %s85, %s86
      %p100 = scmp.eq.s32.totalorder %s17, 1
      %p101 = por %p99, %p100
      %p103 = scmp.ne.s32.totalorder %s86, %s102
      %p104 = scmp.eq.s32.totalorder %s17, 0
      %p105 = por %p103, %p104
      %p106 = scmp.le.s32.totalorder 1, %s11
      %p107 = scmp.lt.s32.totalorder %s11, 3
      %p108 = pnand %p106, %p107
      %p109 = pneg %p108
      // Predicated region
      $region9: #{tpu_custom_call.1} parent=5 // pred_check
        _
      $region10: #{tpu_custom_call.1} parent=5 // pred_check_branch
        %111 = sbr.rel (%p108) target = $region12
      $region11: #{tpu_custom_call.1} parent=5 // pred_region
        %s112 = ssub.s32 %s11, 1
        // Predicated region
        $region13: #{tpu_custom_call.1} parent=11 // pred_check
          %p113 = pneg %p72
        $region14: #{tpu_custom_call.1} parent=11 // pred_check_branch
          %115 = sbr.rel (%p113) target = $region16
        $region15: #{tpu_custom_call.1} parent=11 // pred_region
          _
        $region16: #{tpu_custom_call.1} parent=11 // pred_fallthru
          _
      $region12: #{tpu_custom_call.1} parent=5 // pred_fallthru
        _
      %p116 = scmp.lt.s32.totalorder %s11, 2
      // Predicated region
      $region17: #{tpu_custom_call.1} parent=5 // pred_check
        %p117 = pneg %p116
      $region18: #{tpu_custom_call.1} parent=5 // pred_check_branch
        %119 = sbr.rel (%p117) target = $region20
      $region19: #{tpu_custom_call.1} parent=5 // pred_region
        // Predicated region
        $region21: #{tpu_custom_call.1} parent=19 // pred_check
          %p120 = pneg %p45
        $region22: #{tpu_custom_call.1} parent=19 // pred_check_branch
          %122 = sbr.rel (%p120) target = $region24
        $region23: #{tpu_custom_call.1} parent=19 // pred_region
          %s123 = sand.u32 %s35, 1
          %s124 = scalar_lea.sflag [#allocation4], %s123
          %s125 = sand.u32 %s35, 1
          %s126 = smul.addr %s125, 8
          %s127 = scalar_lea.vmem [#allocation3], %s126
          %s128 = smul.u32 2, %s19
          %130 = vsyncadd %s124, 0
          %s131 = smul.addr %s18, 2
          %s132 = sadd.s32 %s128, %s131
          %s133 = smul.addr %s132, 4
          %s134 = scalar_lea.hbm %s0, %s133
          %s136 = sshll.u32 %s134, 4
          %s137 = int_to_ptr.hbm [resolvable:$true] %s136
          %s138 = sshll.u32 %s127, 4
          %s139 = int_to_ptr.vmem [resolvable:$true] %s138
          %141 = dma.hbm_to_vmem [thread:$0]  %s137, 128, %s139, %s124
        $region24: #{tpu_custom_call.1} parent=19 // pred_fallthru
          _
      $region20: #{tpu_custom_call.1} parent=5 // pred_fallthru
        _
      %p142 = scmp.le.s32.totalorder 1, %s11
      %p143 = scmp.lt.s32.totalorder %s11, 3
      %p144 = pnand %p142, %p143
      %p145 = pneg %p144
      // Predicated region
      $region25: #{tpu_custom_call.1} parent=5 // pred_check
        _
      $region26: #{tpu_custom_call.1} parent=5 // pred_check_branch
        %147 = sbr.rel (%p144) target = $region28
      $region27: #{tpu_custom_call.1} parent=5 // pred_region
        %s148 = ssub.s32 %s11, 1
        %s149 = sand.u32 %s38, 1
        %s150 = scalar_lea.sflag [#allocation4], %s149
        %s151 = sand.u32 %s38, 1
        %s152 = smul.addr %s151, 8
        %s153 = scalar_lea.vmem [#allocation3], %s152
        // Predicated region
        $region29: #{tpu_custom_call.1} parent=27 // pred_check
          %p154 = pneg %p51
        $region30: #{tpu_custom_call.1} parent=27 // pred_check_branch
          %156 = sbr.rel (%p154) target = $region32
        $region31: #{tpu_custom_call.1} parent=27 // pred_region
          %158 = dma.done %s150, 128
        $region32: #{tpu_custom_call.1} parent=27 // pred_fallthru
          _
        %s159 = sand.u32 %s38, 1
        %s160 = scalar_lea.sflag [#allocation4], %s159
        %s161 = sand.u32 %s38, 1
        %s162 = smul.addr %s161, 8
        %s163 = scalar_lea.vmem [#allocation3], %s162
        %p164 = pneg %p51
        %p165 = pneg %p48
        %p166 = pneg %p72
        %p167 = pneg %p69
        %p168 = pneg %p98
        %p169 = pneg %p95
        %p170 = scmp.lt.s32.totalorder %s20, 1
        %s171 = scalar_select %p170, %s20, 1
        %s172 = smul.addr %s171, 8
        %s173 = scalar_lea.vmem %s2, %s172
        %s174 = smul.u32 2, %s21
        %p175 = scmp.lt.s32.totalorder %s20, 1
        %s176 = scalar_select %p175, %s20, 1
        %s177 = smul.addr %s176, 8
        %s178 = scalar_lea.vmem %s2, %s177
        %p179 = scmp.eq.s32.totalorder %s21, 0
        // Predicated region
        $region33: #{tpu_custom_call.1} parent=27 // pred_check
          %p180 = pneg %p179
        $region34: #{tpu_custom_call.1} parent=27 // pred_check_branch
          %182 = sbr.rel (%p180) target = $region36
        $region35: #{tpu_custom_call.1} parent=27 // pred_region
          %183 = vst [vmem:[#allocation2] sm:$0xf] 0.0
        $region36: #{tpu_custom_call.1} parent=27 // pred_fallthru
          _
        %v184 = vld [vmem:[%s153] sm:$0xff]
        %v185 = vld [vmem:[#allocation2] sm:$0xf]
        %v186 = vadd.f32 %v185, %v184
        %188 = vst [vmem:[#allocation1] ss:$2 sm:$0xff] %v184
        %v189 = vld.sshfl [vmem:[#allocation1 + $0x8] sm:$0xff pattern:$0x75316420]
        %v191 = vadd.f32 %v186, %v189
        %192 = vst [vmem:[#allocation2] sm:$0xf] %v191
        // Predicated region
        $region37: #{tpu_custom_call.1} parent=27 // pred_check
          %p193 = pneg %p179
        $region38: #{tpu_custom_call.1} parent=27 // pred_check_branch
          %195 = sbr.rel (%p193) target = $region40
        $region39: #{tpu_custom_call.1} parent=27 // pred_region
          %v196 = vld [vmem:[#allocation2] sm:$0xf]
          %vm197 = vcmask 1043456
          %v198 = vsel %vm197, %v196, 0.0
          %199 = vadd.xlane.f32.xlu0 %v198
          %v200 = vpop.xlane.xlu0 %199
          %v201 = vmul.f32 %v200, 0.00390625
          %v202 = vld [vmem:[%s1] sm:$0xff]
          %vm203 = vcmask 31744
          %v205 = vsel %vm203, %v202, 0
          %v208 = vsel %vm197, %v201, 0
          %210 = vmatpush.msra.mxu0 0.0
          %211 = vmatpush.msra.mxu0 0.0
          %212 = vmatpush.msra.mxu0 0.0
          %213 = vmatpush.msra.mxu0 0.0
          %214 = vmatpush.msra.mxu0 0.0
          %215 = vmatpush.msra.mxu0 0.0
          %216 = vmatpush.msra.mxu0 0.0
          %217 = vmatpush.msra.mxu0 0.0
          %218 = vmatpush.msra.mxu0 0.0
          %219 = vmatpush.msra.mxu0 0.0
          %220 = vmatpush.msra.mxu0 0.0
          %221 = vmatpush.msra.mxu0 0.0
          %222 = vmatpush.msra.mxu0 0.0
          %223 = vmatpush.msra.mxu0 0.0
          %224 = vmatpush.msra.mxu0 0.0
          %225 = vmatpush.msra.mxu0 %v208
          %226 = vmatmul.f32.gmra.mxu0 %v205
          %v227 = vpop.f32.mrf.mxu0
          %v228 = vadd.f32 0.0, %v227
          %229 = vdwg.mxu0
          %v230 = vmax.f32 %v228, 0.0
          %vm231 = vcmask 7168
          %232 = vst.msk [vmem:[%s178] sm:$0xff] %vm231, %v230
        $region40: #{tpu_custom_call.1} parent=27 // pred_fallthru
          _
        %p233 = scmp.lt.s32.totalorder %s20, 1
        %s234 = scalar_select %p233, %s20, 1
        %s235 = smul.addr %s234, 8
        %s236 = scalar_lea.vmem %s2, %s235
        // Predicated region
        $region41: #{tpu_custom_call.1} parent=27 // pred_check
          %p237 = pneg %p95
        $region42: #{tpu_custom_call.1} parent=27 // pred_check_branch
          %239 = sbr.rel (%p237) target = $region44
        $region43: #{tpu_custom_call.1} parent=27 // pred_region
          _
        $region44: #{tpu_custom_call.1} parent=27 // pred_fallthru
          _
      $region28: #{tpu_custom_call.1} parent=5 // pred_fallthru
        _
      %p240 = scmp.le.s32.totalorder 2, %s11
      // Predicated region
      $region45: #{tpu_custom_call.1} parent=5 // pred_check
        %p241 = pneg %p240
      $region46: #{tpu_custom_call.1} parent=5 // pred_check_branch
        %243 = sbr.rel (%p241) target = $region48
      $region47: #{tpu_custom_call.1} parent=5 // pred_region
        %s244 = ssub.s32 %s11, 2
        // Predicated region
        $region49: #{tpu_custom_call.1} parent=47 // pred_check
          %p245 = pneg %p101
        $region50: #{tpu_custom_call.1} parent=47 // pred_check_branch
          %247 = sbr.rel (%p245) target = $region52
        $region51: #{tpu_custom_call.1} parent=47 // pred_region
          %p248 = scmp.lt.s32.totalorder %s22, 1
          %s249 = scalar_select %p248, %s22, 1
          %s250 = smul.addr %s249, 8
          %s251 = scalar_lea.vmem %s2, %s250
        $region52: #{tpu_custom_call.1} parent=47 // pred_fallthru
          _
      $region48: #{tpu_custom_call.1} parent=5 // pred_fallthru
        _
    $region6: #{tpu_custom_call.1} parent=1 // loop_footer
      %s15 = sadd.s32 1, %s11
    $region7: #{tpu_custom_call.1} parent=1 // loop_footer_branch
      %10 = sbr.rel target = $region3
    $region8: #{tpu_custom_call.1} parent=1 // loop_exit
      _
    %252 = vsyncpa [#allocation4], 1
    %s253 = scalar_lea.sflag [#allocation4], 1
    %254 = vsyncpa %s253, 1

</llo_original>
